<compile_context>
chip_gen: v6e
topology: v6e:2x2x1
jax: 0.10.0
libtpu: 0.0.40
codegen_flags: <defaults>
</compile_context>

<pallas_src>
import math

import jax
import jax.numpy as jnp
from jax.experimental import pallas as pl
from jax.experimental.pallas import tpu as pltpu  # noqa: F401  (kept for TPU-specific tuning hooks)

D_MODEL = 32
NHEAD = 4
DIM_FF = 64
HEAD_DIM = D_MODEL // NHEAD
LN_EPS = 1e-5


# --------------------------------------------------------------------------------------
# Fused kernel: whole layer, one program, batch packed into lanes (columns = b*D + d).
# --------------------------------------------------------------------------------------
def _encoder_layer_kernel(src_ref, pos_ref, wqk_ref, wvo_ref, w1_ref, w2_ref,
                          const_ref, vec_ref, out_ref):
    f32 = jnp.float32
    S, BD = src_ref.shape                       # (seq, batch * d_model)
    B = BD // D_MODEL
    BF = w1_ref.shape[1]                        # batch * dim_feedforward
    BHS = B * NHEAD * S                         # rows of the (batch, head) selector

    src = src_ref[...].astype(f32)              # (S, BD)  value / residual input
    x = src + pos_ref[...].astype(f32)          # (S, BD)  q/k input = src + pos

    sel = const_ref[0:BHS, :]                   # (B*H*S, BD): 1 where column's (batch, head) == row's
    mavg = const_ref[BHS:BHS + BD, :]           # (BD, BD):    per-batch-block mean matrix (1/D)

    # ---- projections (pre-transposed, pre-scaled, batch-block-diagonal weight slabs) ----
    qk = jnp.dot(x, wqk_ref[...], preferred_element_type=f32) + vec_ref[0:S, :2 * BD]   # (S, 2*BD)
    q = qk[:, :BD]                              # 1/sqrt(head_dim) already folded into W_q / b_q
    k = qk[:, BD:]
    v = jnp.dot(src, wvo_ref[0:BD, :], preferred_element_type=f32) + vec_ref[S:2 * S, :BD]

    # ---- attention: every (batch, head) pair handled by single matmuls via block-diag packing ----
    n_blk = BHS // S                            # B * H
    k_bd = sel * jnp.concatenate([k] * n_blk, axis=0)          # (B*H*S, BD)
    v_bd = sel * jnp.concatenate([v] * n_blk, axis=0)          # (B*H*S, BD)

    # scores[s, (b*H + h)*S + t] = <q_b[s, head h], k_b[t, head h]>
    scores = jax.lax.dot_general(q, k_bd, (((1,), (1,)), ((), ())),
                                 preferred_element_type=f32)   # (S, B*H*S)
    m = jnp.max(scores, axis=-1, keepdims=True)                # global row max: exact shift per block
    p = jnp.exp(scores - m)                                    # un-normalised probabilities

    # Normalise AFTER the value matmul: o_un and denom are independent matmuls (overlap on MXU),
    # then one EUP reciprocal + VPU multiply — one fewer serial MXU hop than normalise-then-matmul.
    o_un = jnp.dot(p, v_bd, preferred_element_type=f32)        # (S, BD)
    denom = jnp.dot(p, sel, preferred_element_type=f32)        # per-(b,h) sum, broadcast per column
    o = o_un * pl.reciprocal(jnp.maximum(denom, 1e-37), approx=True)

    attn = jnp.dot(o, wvo_ref[BD:, :], preferred_element_type=f32) + vec_ref[2 * S:3 * S, :BD]

    # ---- residual + LayerNorm1 (per-batch-block mean / E[x^2] via two parallel mavg matmuls) ----
    y = src + attn
    mu = jnp.dot(y, mavg, preferred_element_type=f32)
    ex2 = jnp.dot(y * y, mavg, preferred_element_type=f32)
    x1 = (y - mu) * jax.lax.rsqrt(ex2 - mu * mu + LN_EPS)
    x1 = x1 * vec_ref[5 * S:6 * S, :BD] + vec_ref[6 * S:7 * S, :BD]

    # ---- FFN: linear1 -> relu -> linear2 ----
    h1 = jnp.dot(x1, w1_ref[...], preferred_element_type=f32) + vec_ref[3 * S:4 * S, :BF]
    h1 = jnp.maximum(h1, 0.0)
    y2 = jnp.dot(h1, w2_ref[...], preferred_element_type=f32) + vec_ref[4 * S:5 * S, :BD]

    # ---- residual + LayerNorm2 ----
    z = x1 + y2
    mu2 = jnp.dot(z, mavg, preferred_element_type=f32)
    ez2 = jnp.dot(z * z, mavg, preferred_element_type=f32)
    out = (z - mu2) * jax.lax.rsqrt(ez2 - mu2 * mu2 + LN_EPS)
    out = out * vec_ref[7 * S:8 * S, :BD] + vec_ref[8 * S:9 * S, :BD]

    out_ref[...] = out.astype(out_ref.dtype)


# --------------------------------------------------------------------------------------
# One-time parameter preparation (hoisted out of the per-call path — call once, reuse).
# --------------------------------------------------------------------------------------
def prepare_params(params, *, batch, seq):
    f32 = jnp.float32
    D, Dh, F, H, B, S = D_MODEL, HEAD_DIM, DIM_FF, NHEAD, batch, seq
    scale = 1.0 / math.sqrt(Dh)

    in_w = params["in_proj_w"].astype(f32)
    in_b = params["in_proj_b"].astype(f32)
    wq, wk, wv = in_w[:D], in_w[D:2 * D], in_w[2 * D:]
    bq, bk, bv = in_b[:D], in_b[D:2 * D], in_b[2 * D:]

    eye_b = jnp.eye(B, dtype=f32)
    bdiag = lambda w: jnp.kron(eye_b, w.astype(f32))               # batch-block-diagonal

    w_qk = jnp.concatenate([bdiag((scale * wq).T), bdiag(wk.T)], axis=1)          # (B*D, 2*B*D)
    w_vo = jnp.concatenate([bdiag(wv.T), bdiag(params["out_proj_w"].T)], axis=0)  # (2*B*D, B*D)
    w_1 = bdiag(params["lin1_w"].T)                                               # (B*D, B*F)
    w_2 = bdiag(params["lin2_w"].T)                                               # (B*F, B*D)

    # (batch, head) selector — doubles as the softmax-denominator broadcast map — and the
    # per-batch-block mean matrix for LayerNorm, packed into one constant slab.
    sel = jnp.kron(eye_b, jnp.kron(jnp.eye(H, dtype=f32), jnp.ones((S, Dh), f32)))  # (B*H*S, B*D)
    mavg = jnp.kron(eye_b, jnp.full((D, D), 1.0 / D, f32))                           # (B*D, B*D)
    consts = jnp.concatenate([sel, mavg], axis=0)                                    # (B*H*S+B*D, B*D)

    # Bias / LayerNorm vectors: batch-tiled, padded into one lane-dense slab, pre-broadcast to S
    # sublanes so the in-kernel adds need no broadcast op.
    tile_b = lambda a: jnp.tile(a.astype(f32), B)
    rows = [
        jnp.concatenate([tile_b(scale * bq), tile_b(bk)]),   # 0: qk bias (softmax scale folded in)
        tile_b(bv),                                          # 1: v bias
        tile_b(params["out_proj_b"]),                        # 2: out-proj bias
        tile_b(params["lin1_b"]),                            # 3: ffn bias 1
        tile_b(params["lin2_b"]),                            # 4: ffn bias 2
        tile_b(params["ln1_g"]), tile_b(params["ln1_b"]),    # 5, 6: LayerNorm1 gamma / beta
        tile_b(params["ln2_g"]), tile_b(params["ln2_b"]),    # 7, 8: LayerNorm2 gamma / beta
    ]
    width = max(2 * B * D, B * F)
    vec = jnp.stack([jnp.pad(r, (0, width - r.shape[0])) for r in rows])   # (9, width)
    vec = jnp.repeat(vec, S, axis=0)                                        # (9*S, width)
    return w_qk, w_vo, w_1, w_2, consts, vec


@jax.jit
def transformer_encoder_layer(src_sbd, pos_sbd, w_qk, w_vo, w_1, w_2, consts, vec):
    """src_sbd, pos_sbd: (S, B, D) in PyTorch's (seq, batch, d_model) layout. Returns (S, B, D)."""
    S, B, D = src_sbd.shape
    src = src_sbd.reshape(S, B * D)       # free contiguous reshape: batch*d_model packed into lanes
    pos = pos_sbd.reshape(S, B * D)
    out = pl.pallas_call(
        _encoder_layer_kernel,
        out_shape=jax.ShapeDtypeStruct((S, B * D), src_sbd.dtype),
        # no grid / specs: single program, every operand is a whole-array VMEM block
    )(src, pos, w_qk, w_vo, w_1, w_2, consts, vec)
    return out.reshape(S, B, D)


# --------------------------------------------------------------------------------------
# Plain-JAX reference (f32-precision matmuls) mirroring torch forward_post, for the check.
# --------------------------------------------------------------------------------------
def _reference(src_sbd, pos_sbd, params):
    D = D_MODEL
    with jax.default_matmul_precision("float32"):
        src = jnp.transpose(src_sbd, (1, 0, 2)).astype(jnp.float32)
        pos = jnp.transpose(pos_sbd, (1, 0, 2)).astype(jnp.float32)
        x = src + pos
        wq, wk, wv = (params["in_proj_w"][i * D:(i + 1) * D] for i in range(3))
        bq, bk, bv = (params["in_proj_b"][i * D:(i + 1) * D] for i in range(3))
        q = x @ wq.T + bq
        k = x @ wk.T + bk
        v = src @ wv.T + bv
        B, S, _ = q.shape
        qh = q.reshape(B, S, NHEAD, HEAD_DIM).transpose(0, 2, 1, 3) / math.sqrt(HEAD_DIM)
        kh = k.reshape(B, S, NHEAD, HEAD_DIM).transpose(0, 2, 1, 3)
        vh = v.reshape(B, S, NHEAD, HEAD_DIM).transpose(0, 2, 1, 3)
        pattn = jax.nn.softmax(jnp.einsum("bhqd,bhkd->bhqk", qh, kh), axis=-1)
        o = jnp.einsum("bhqk,bhkd->bhqd", pattn, vh).transpose(0, 2, 1, 3).reshape(B, S, D)
        attn = o @ params["out_proj_w"].T + params["out_proj_b"]

        def ln(t, g, b):
            mu = t.mean(-1, keepdims=True)
            var = ((t - mu) ** 2).mean(-1, keepdims=True)
            return (t - mu) * jax.lax.rsqrt(var + LN_EPS) * g + b

        x1 = ln(src + attn, params["ln1_g"], params["ln1_b"])
        h = jnp.maximum(x1 @ params["lin1_w"].T + params["lin1_b"], 0.0)
        y = h @ params["lin2_w"].T + params["lin2_b"]
        out = ln(x1 + y, params["ln2_g"], params["ln2_b"])
        return jnp.transpose(out, (1, 0, 2))


def _init_params(key):
    ks = jax.random.split(key, 8)
    s = 0.05
    return {
        "in_proj_w": s * jax.random.normal(ks[0], (3 * D_MODEL, D_MODEL), jnp.float32),
        "in_proj_b": s * jax.random.normal(ks[1], (3 * D_MODEL,), jnp.float32),
        "out_proj_w": s * jax.random.normal(ks[2], (D_MODEL, D_MODEL), jnp.float32),
        "out_proj_b": s * jax.random.normal(ks[3], (D_MODEL,), jnp.float32),
        "lin1_w": s * jax.random.normal(ks[4], (DIM_FF, D_MODEL), jnp.float32),
        "lin1_b": s * jax.random.normal(ks[5], (DIM_FF,), jnp.float32),
        "lin2_w": s * jax.random.normal(ks[6], (D_MODEL, DIM_FF), jnp.float32),
        "lin2_b": s * jax.random.normal(ks[7], (DIM_FF // 2 * 0 + D_MODEL,), jnp.float32),
        "ln1_g": jnp.ones((D_MODEL,), jnp.float32),
        "ln1_b": jnp.zeros((D_MODEL,), jnp.float32),
        "ln2_g": jnp.ones((D_MODEL,), jnp.float32),
        "ln2_b": jnp.zeros((D_MODEL,), jnp.float32),
    }


if __name__ == "__main__":
    key = jax.random.PRNGKey(0)
    k_src, k_pos, k_par = jax.random.split(key, 3)
    S, B = 8, 2
    src = jax.random.normal(k_src, (S, B, D_MODEL), jnp.float32)   # (seq, batch, d_model)
    pos = jax.random.normal(k_pos, (S, B, D_MODEL), jnp.float32)
    params = _init_params(k_par)

    prepped = prepare_params(params, batch=B, seq=S)   # one-time prep, reused across calls
    out = transformer_encoder_layer(src, pos, *prepped)
    out = jax.block_until_ready(out)

    ref = _reference(src, pos, params)
    assert out.shape == (S, B, D_MODEL)
    err = float(jnp.max(jnp.abs(out - ref)))
    # Tolerance covers MXU / default-matmul-precision rounding differences between the two
    # computation orders plus the approximate (2^-12) softmax reciprocal; any structural bug
    # would produce errors ~2 orders of magnitude larger.
    assert err < 5e-3, f"mismatch vs reference: max abs err = {err:.3e}"
    print("KERNEL_OK")
</pallas_src>

<mosaic_0001>
module attributes {stable_mosaic.version = 11 : i64} {
  func.func @_encoder_layer_kernel(%arg0: memref<8x64xf32, #tpu.memory_space<vmem>>, %arg1: memref<8x64xf32, #tpu.memory_space<vmem>>, %arg2: memref<64x128xf32, #tpu.memory_space<vmem>>, %arg3: memref<128x64xf32, #tpu.memory_space<vmem>>, %arg4: memref<64x128xf32, #tpu.memory_space<vmem>>, %arg5: memref<128x64xf32, #tpu.memory_space<vmem>>, %arg6: memref<128x64xf32, #tpu.memory_space<vmem>>, %arg7: memref<72x128xf32, #tpu.memory_space<vmem>>, %arg8: memref<8x64xf32, #tpu.memory_space<vmem>>) attributes {dimension_semantics = [], scalar_prefetch = 0 : i64, scratch_operands = 0 : i64, tpu.core_type = #tpu.core_type<tc>} {
    %c0 = arith.constant 0 : index
    %c0_0 = arith.constant 0 : index
    %0 = vector.load %arg0[%c0, %c0_0] : memref<8x64xf32, #tpu.memory_space<vmem>>, vector<8x64xf32>
    %c0_1 = arith.constant 0 : index
    %c0_2 = arith.constant 0 : index
    %1 = vector.load %arg1[%c0_1, %c0_2] : memref<8x64xf32, #tpu.memory_space<vmem>>, vector<8x64xf32>
    %2 = arith.addf %0, %1 : vector<8x64xf32>
    %c0_3 = arith.constant 0 : index
    %c0_4 = arith.constant 0 : index
    %3 = vector.load %arg6[%c0_3, %c0_4] : memref<128x64xf32, #tpu.memory_space<vmem>>, vector<64x64xf32>
    %c64 = arith.constant 64 : index
    %c0_5 = arith.constant 0 : index
    %4 = vector.load %arg6[%c64, %c0_5] : memref<128x64xf32, #tpu.memory_space<vmem>>, vector<64x64xf32>
    %c0_6 = arith.constant 0 : index
    %c0_7 = arith.constant 0 : index
    %5 = vector.load %arg2[%c0_6, %c0_7] : memref<64x128xf32, #tpu.memory_space<vmem>>, vector<64x128xf32>
    %cst = arith.constant dense<0.000000e+00> : vector<8x128xf32>
    %6 = tpu.matmul %2, %5, %cst {dimension_numbers = #tpu.dot_dimension_numbers<[1], [0], [0], [1], [0, 0, 1, 1], [], []>} : vector<8x64xf32>, vector<64x128xf32>, vector<8x128xf32> -> vector<8x128xf32>
    %c0_8 = arith.constant 0 : index
    %c0_9 = arith.constant 0 : index
    %7 = vector.load %arg7[%c0_8, %c0_9] : memref<72x128xf32, #tpu.memory_space<vmem>>, vector<8x128xf32>
    %8 = arith.addf %6, %7 : vector<8x128xf32>
    %9 = vector.extract_strided_slice %8 {offsets = [0, 0], sizes = [8, 64], strides = [1, 1]} : vector<8x128xf32> to vector<8x64xf32>
    %10 = vector.extract_strided_slice %8 {offsets = [0, 64], sizes = [8, 64], strides = [1, 1]} : vector<8x128xf32> to vector<8x64xf32>
    %c0_10 = arith.constant 0 : index
    %c0_11 = arith.constant 0 : index
    %11 = vector.load %arg3[%c0_10, %c0_11] : memref<128x64xf32, #tpu.memory_space<vmem>>, vector<64x64xf32>
    %cst_12 = arith.constant dense<0.000000e+00> : vector<8x64xf32>
    %12 = tpu.matmul %0, %11, %cst_12 {dimension_numbers = #tpu.dot_dimension_numbers<[1], [0], [0], [1], [0, 0, 1, 1], [], []>} : vector<8x64xf32>, vector<64x64xf32>, vector<8x64xf32> -> vector<8x64xf32>
    %c8 = arith.constant 8 : index
    %c0_13 = arith.constant 0 : index
    %13 = vector.load %arg7[%c8, %c0_13] : memref<72x128xf32, #tpu.memory_space<vmem>>, vector<8x64xf32>
    %14 = arith.addf %12, %13 : vector<8x64xf32>
    %15 = tpu.concatenate %10, %10, %10, %10, %10, %10, %10, %10 in 0 : vector<8x64xf32>, vector<8x64xf32>, vector<8x64xf32>, vector<8x64xf32>, vector<8x64xf32>, vector<8x64xf32>, vector<8x64xf32>, vector<8x64xf32> -> vector<64x64xf32>
    %16 = arith.mulf %3, %15 : vector<64x64xf32>
    %17 = tpu.concatenate %14, %14, %14, %14, %14, %14, %14, %14 in 0 : vector<8x64xf32>, vector<8x64xf32>, vector<8x64xf32>, vector<8x64xf32>, vector<8x64xf32>, vector<8x64xf32>, vector<8x64xf32>, vector<8x64xf32> -> vector<64x64xf32>
    %18 = arith.mulf %3, %17 : vector<64x64xf32>
    %cst_14 = arith.constant dense<0.000000e+00> : vector<8x64xf32>
    %19 = tpu.matmul %9, %16, %cst_14 {dimension_numbers = #tpu.dot_dimension_numbers<[1], [1], [0], [0], [0, 0, 1, 0], [], []>} : vector<8x64xf32>, vector<64x64xf32>, vector<8x64xf32> -> vector<8x64xf32>
    %cst_15 = arith.constant dense<0xFF800000> : vector<8xf32>
    %20 = vector.multi_reduction <maximumf>, %19, %cst_15 [1] : vector<8x64xf32> to vector<8xf32>
    %21 = vector.shape_cast %20 : vector<8xf32> to vector<8x1xf32>
    %22 = vector.broadcast %21 : vector<8x1xf32> to vector<8x64xf32>
    %23 = arith.subf %19, %22 : vector<8x64xf32>
    %24 = math.exp %23 : vector<8x64xf32>
    %cst_16 = arith.constant dense<0.000000e+00> : vector<8x64xf32>
    %25 = tpu.matmul %24, %18, %cst_16 {dimension_numbers = #tpu.dot_dimension_numbers<[1], [0], [0], [1], [0, 0, 1, 1], [], []>} : vector<8x64xf32>, vector<64x64xf32>, vector<8x64xf32> -> vector<8x64xf32>
    %cst_17 = arith.constant dense<0.000000e+00> : vector<8x64xf32>
    %26 = tpu.matmul %24, %3, %cst_17 {dimension_numbers = #tpu.dot_dimension_numbers<[1], [0], [0], [1], [0, 0, 1, 1], [], []>} : vector<8x64xf32>, vector<64x64xf32>, vector<8x64xf32> -> vector<8x64xf32>
    %cst_18 = arith.constant 9.99999991E-38 : f32
    %27 = vector.broadcast %cst_18 : f32 to vector<8x64xf32>
    %28 = arith.maximumf %26, %27 : vector<8x64xf32>
    %29 = tpu.reciprocal %28 {approx = true} : vector<8x64xf32> -> vector<8x64xf32>
    %30 = arith.mulf %25, %29 : vector<8x64xf32>
    %c64_19 = arith.constant 64 : index
    %c0_20 = arith.constant 0 : index
    %31 = vector.load %arg3[%c64_19, %c0_20] : memref<128x64xf32, #tpu.memory_space<vmem>>, vector<64x64xf32>
    %cst_21 = arith.constant dense<0.000000e+00> : vector<8x64xf32>
    %32 = tpu.matmul %30, %31, %cst_21 {dimension_numbers = #tpu.dot_dimension_numbers<[1], [0], [0], [1], [0, 0, 1, 1], [], []>} : vector<8x64xf32>, vector<64x64xf32>, vector<8x64xf32> -> vector<8x64xf32>
    %c16 = arith.constant 16 : index
    %c0_22 = arith.constant 0 : index
    %33 = vector.load %arg7[%c16, %c0_22] : memref<72x128xf32, #tpu.memory_space<vmem>>, vector<8x64xf32>
    %34 = arith.addf %32, %33 : vector<8x64xf32>
    %35 = arith.addf %0, %34 : vector<8x64xf32>
    %cst_23 = arith.constant dense<0.000000e+00> : vector<8x64xf32>
    %36 = tpu.matmul %35, %4, %cst_23 {dimension_numbers = #tpu.dot_dimension_numbers<[1], [0], [0], [1], [0, 0, 1, 1], [], []>} : vector<8x64xf32>, vector<64x64xf32>, vector<8x64xf32> -> vector<8x64xf32>
    %37 = arith.mulf %35, %35 : vector<8x64xf32>
    %cst_24 = arith.constant dense<0.000000e+00> : vector<8x64xf32>
    %38 = tpu.matmul %37, %4, %cst_24 {dimension_numbers = #tpu.dot_dimension_numbers<[1], [0], [0], [1], [0, 0, 1, 1], [], []>} : vector<8x64xf32>, vector<64x64xf32>, vector<8x64xf32> -> vector<8x64xf32>
    %39 = arith.subf %35, %36 : vector<8x64xf32>
    %40 = arith.mulf %36, %36 : vector<8x64xf32>
    %41 = arith.subf %38, %40 : vector<8x64xf32>
    %cst_25 = arith.constant 9.99999974E-6 : f32
    %42 = vector.broadcast %cst_25 : f32 to vector<8x64xf32>
    %43 = arith.addf %41, %42 : vector<8x64xf32>
    %44 = math.rsqrt %43 : vector<8x64xf32>
    %45 = arith.mulf %39, %44 : vector<8x64xf32>
    %c40 = arith.constant 40 : index
    %c0_26 = arith.constant 0 : index
    %46 = vector.load %arg7[%c40, %c0_26] : memref<72x128xf32, #tpu.memory_space<vmem>>, vector<8x64xf32>
    %47 = arith.mulf %45, %46 : vector<8x64xf32>
    %c48 = arith.constant 48 : index
    %c0_27 = arith.constant 0 : index
    %48 = vector.load %arg7[%c48, %c0_27] : memref<72x128xf32, #tpu.memory_space<vmem>>, vector<8x64xf32>
    %49 = arith.addf %47, %48 : vector<8x64xf32>
    %c0_28 = arith.constant 0 : index
    %c0_29 = arith.constant 0 : index
    %50 = vector.load %arg4[%c0_28, %c0_29] : memref<64x128xf32, #tpu.memory_space<vmem>>, vector<64x128xf32>
    %cst_30 = arith.constant dense<0.000000e+00> : vector<8x128xf32>
    %51 = tpu.matmul %49, %50, %cst_30 {dimension_numbers = #tpu.dot_dimension_numbers<[1], [0], [0], [1], [0, 0, 1, 1], [], []>} : vector<8x64xf32>, vector<64x128xf32>, vector<8x128xf32> -> vector<8x128xf32>
    %c24 = arith.constant 24 : index
    %c0_31 = arith.constant 0 : index
    %52 = vector.load %arg7[%c24, %c0_31] : memref<72x128xf32, #tpu.memory_space<vmem>>, vector<8x128xf32>
    %53 = arith.addf %51, %52 : vector<8x128xf32>
    %cst_32 = arith.constant 0.000000e+00 : f32
    %54 = vector.broadcast %cst_32 : f32 to vector<8x128xf32>
    %55 = arith.maximumf %53, %54 : vector<8x128xf32>
    %c0_33 = arith.constant 0 : index
    %c0_34 = arith.constant 0 : index
    %56 = vector.load %arg5[%c0_33, %c0_34] : memref<128x64xf32, #tpu.memory_space<vmem>>, vector<128x64xf32>
    %cst_35 = arith.constant dense<0.000000e+00> : vector<8x64xf32>
    %57 = tpu.matmul %55, %56, %cst_35 {dimension_numbers = #tpu.dot_dimension_numbers<[1], [0], [0], [1], [0, 0, 1, 1], [], []>} : vector<8x128xf32>, vector<128x64xf32>, vector<8x64xf32> -> vector<8x64xf32>
    %c32 = arith.constant 32 : index
    %c0_36 = arith.constant 0 : index
    %58 = vector.load %arg7[%c32, %c0_36] : memref<72x128xf32, #tpu.memory_space<vmem>>, vector<8x64xf32>
    %59 = arith.addf %57, %58 : vector<8x64xf32>
    %60 = arith.addf %49, %59 : vector<8x64xf32>
    %cst_37 = arith.constant dense<0.000000e+00> : vector<8x64xf32>
    %61 = tpu.matmul %60, %4, %cst_37 {dimension_numbers = #tpu.dot_dimension_numbers<[1], [0], [0], [1], [0, 0, 1, 1], [], []>} : vector<8x64xf32>, vector<64x64xf32>, vector<8x64xf32> -> vector<8x64xf32>
    %62 = arith.mulf %60, %60 : vector<8x64xf32>
    %cst_38 = arith.constant dense<0.000000e+00> : vector<8x64xf32>
    %63 = tpu.matmul %62, %4, %cst_38 {dimension_numbers = #tpu.dot_dimension_numbers<[1], [0], [0], [1], [0, 0, 1, 1], [], []>} : vector<8x64xf32>, vector<64x64xf32>, vector<8x64xf32> -> vector<8x64xf32>
    %64 = arith.subf %60, %61 : vector<8x64xf32>
    %65 = arith.mulf %61, %61 : vector<8x64xf32>
    %66 = arith.subf %63, %65 : vector<8x64xf32>
    %cst_39 = arith.constant 9.99999974E-6 : f32
    %67 = vector.broadcast %cst_39 : f32 to vector<8x64xf32>
    %68 = arith.addf %66, %67 : vector<8x64xf32>
    %69 = math.rsqrt %68 : vector<8x64xf32>
    %70 = arith.mulf %64, %69 : vector<8x64xf32>
    %c56 = arith.constant 56 : index
    %c0_40 = arith.constant 0 : index
    %71 = vector.load %arg7[%c56, %c0_40] : memref<72x128xf32, #tpu.memory_space<vmem>>, vector<8x64xf32>
    %72 = arith.mulf %70, %71 : vector<8x64xf32>
    %c64_41 = arith.constant 64 : index
    %c0_42 = arith.constant 0 : index
    %73 = vector.load %arg7[%c64_41, %c0_42] : memref<72x128xf32, #tpu.memory_space<vmem>>, vector<8x64xf32>
    %74 = arith.addf %72, %73 : vector<8x64xf32>
    %c0_43 = arith.constant 0 : index
    %c0_44 = arith.constant 0 : index
    %75 = vector.load %arg8[%c0_43, %c0_44] : memref<8x64xf32, #tpu.memory_space<vmem>>, vector<8x64xf32>
    tpu.vector_store %arg8[%c0_43, %c0_44], %74 {strides = array<i32>} : memref<8x64xf32, #tpu.memory_space<vmem>>, vector<8x64xf32>,
    return
  }
}

</mosaic_0001>

<llo_original>
// kernel: transformer_encoder_layer.1
$region0: #{transformer_encoder_layer.1}
  #allocation0 [shape = 'u32[]', space=smem, size = 0x4, offset = 0x4, fixed_abs, tag = 'smem constant byte address 0x4 - core index']
  #allocation1 [shape = 'u32[144,128]{1,0:T(1,128)}', space=vmem, size = 0x12000, scoped, tag = 'internal scratch']
  %s0 = inlined_call_operand.vmem [shape: f32[8,64], index: 0, kind: input, shape index: {}]
  %s1 = inlined_call_operand.vmem [shape: f32[8,64], index: 1, kind: input, shape index: {}]
  %s2 = inlined_call_operand.vmem [shape: f32[64,128], index: 2, kind: input, shape index: {}]
  %s3 = inlined_call_operand.vmem [shape: f32[128,64], index: 3, kind: input, shape index: {}]
  %s4 = inlined_call_operand.vmem [shape: f32[64,128], index: 4, kind: input, shape index: {}]
  %s5 = inlined_call_operand.vmem [shape: f32[128,64], index: 5, kind: input, shape index: {}]
  %s6 = inlined_call_operand.vmem [shape: f32[128,64], index: 6, kind: input, shape index: {}]
  %s7 = inlined_call_operand.vmem [shape: f32[72,128], index: 7, kind: input, shape index: {}]
  %s8 = inlined_call_operand.vmem [shape: f32[8,64], index: 8, kind: output, shape index: {}]
  %s9 = sld [smem:[#allocation0]]
  $region42: #{transformer_encoder_layer.1} parent=0
    _
  %s11 = ssub.s32 1, %s9
  %s12 = scalar_select 0, %s11, %s9
  // Predicated region
  $region2: #{transformer_encoder_layer.1} parent=0 // pred_check
    _
  $region3: #{transformer_encoder_layer.1} parent=0 // pred_check_branch
    %14 = sbr.rel (0) target = $region5
  $region4: #{transformer_encoder_layer.1} parent=0 // pred_region
    _
  $region5: #{transformer_encoder_layer.1} parent=0 // pred_fallthru
    _
  // Predicated region
  $region6: #{transformer_encoder_layer.1} parent=0 // pred_check
    _
  $region7: #{transformer_encoder_layer.1} parent=0 // pred_check_branch
    %16 = sbr.rel (0) target = $region9
  $region8: #{transformer_encoder_layer.1} parent=0 // pred_region
    _
  $region9: #{transformer_encoder_layer.1} parent=0 // pred_fallthru
    _
  // Predicated region
  $region10: #{transformer_encoder_layer.1} parent=0 // pred_check
    _
  $region11: #{transformer_encoder_layer.1} parent=0 // pred_check_branch
    %18 = sbr.rel (0) target = $region13
  $region12: #{transformer_encoder_layer.1} parent=0 // pred_region
    _
  $region13: #{transformer_encoder_layer.1} parent=0 // pred_fallthru
    _
  // Predicated region
  $region14: #{transformer_encoder_layer.1} parent=0 // pred_check
    _
  $region15: #{transformer_encoder_layer.1} parent=0 // pred_check_branch
    %20 = sbr.rel (0) target = $region17
  $region16: #{transformer_encoder_layer.1} parent=0 // pred_region
    _
  $region17: #{transformer_encoder_layer.1} parent=0 // pred_fallthru
    _
  // Predicated region
  $region18: #{transformer_encoder_layer.1} parent=0 // pred_check
    _
  $region19: #{transformer_encoder_layer.1} parent=0 // pred_check_branch
    %22 = sbr.rel (0) target = $region21
  $region20: #{transformer_encoder_layer.1} parent=0 // pred_region
    _
  $region21: #{transformer_encoder_layer.1} parent=0 // pred_fallthru
    _
  // Predicated region
  $region22: #{transformer_encoder_layer.1} parent=0 // pred_check
    _
  $region23: #{transformer_encoder_layer.1} parent=0 // pred_check_branch
    %24 = sbr.rel (0) target = $region25
  $region24: #{transformer_encoder_layer.1} parent=0 // pred_region
    _
  $region25: #{transformer_encoder_layer.1} parent=0 // pred_fallthru
    _
  // Predicated region
  $region26: #{transformer_encoder_layer.1} parent=0 // pred_check
    _
  $region27: #{transformer_encoder_layer.1} parent=0 // pred_check_branch
    %26 = sbr.rel (0) target = $region29
  $region28: #{transformer_encoder_layer.1} parent=0 // pred_region
    _
  $region29: #{transformer_encoder_layer.1} parent=0 // pred_fallthru
    _
  // Predicated region
  $region30: #{transformer_encoder_layer.1} parent=0 // pred_check
    _
  $region31: #{transformer_encoder_layer.1} parent=0 // pred_check_branch
    %28 = sbr.rel (0) target = $region33
  $region32: #{transformer_encoder_layer.1} parent=0 // pred_region
    _
  $region33: #{transformer_encoder_layer.1} parent=0 // pred_fallthru
    _
  %v29 = vld [vmem:[%s0] sm:$0xff]
  %v30 = vld [vmem:[%s1] sm:$0xff]
  %v31 = vadd.f32 %v29, %v30
  %v32 = vld [vmem:[%s6] sm:$0xff]
  %v33 = vld [vmem:[%s6 + $0x8] sm:$0xff]
  %v34 = vld [vmem:[%s6 + $0x10] sm:$0xff]
  %v35 = vld [vmem:[%s6 + $0x18] sm:$0xff]
  %v36 = vld [vmem:[%s6 + $0x20] sm:$0xff]
  %v37 = vld [vmem:[%s6 + $0x28] sm:$0xff]
  %v38 = vld [vmem:[%s6 + $0x30] sm:$0xff]
  %v39 = vld [vmem:[%s6 + $0x38] sm:$0xff]
  %v40 = vld [vmem:[%s6 + $0x40] sm:$0xff]
  %v41 = vld [vmem:[%s6 + $0x48] sm:$0xff]
  %v42 = vld [vmem:[%s6 + $0x50] sm:$0xff]
  %v43 = vld [vmem:[%s6 + $0x58] sm:$0xff]
  %v44 = vld [vmem:[%s6 + $0x60] sm:$0xff]
  %v45 = vld [vmem:[%s6 + $0x68] sm:$0xff]
  %v46 = vld [vmem:[%s6 + $0x70] sm:$0xff]
  %v47 = vld [vmem:[%s6 + $0x78] sm:$0xff]
  %v48 = vld [vmem:[%s2] sm:$0xff]
  %v49 = vld [vmem:[%s2 + $0x8] sm:$0xff]
  %v50 = vld [vmem:[%s2 + $0x10] sm:$0xff]
  %v51 = vld [vmem:[%s2 + $0x18] sm:$0xff]
  %v52 = vld [vmem:[%s2 + $0x20] sm:$0xff]
  %v53 = vld [vmem:[%s2 + $0x28] sm:$0xff]
  %v54 = vld [vmem:[%s2 + $0x30] sm:$0xff]
  %v55 = vld [vmem:[%s2 + $0x38] sm:$0xff]
  %v56 = vld [vmem:[%s7] sm:$0xff]
  %vm57 = vcmask 523264
  %v59 = vsel %vm57, %v31, 0
  %61 = vmatprep.subr.mxu0 0.0
  %62 = vmatpush1.msra.mxu0 0.0
  %63 = vmatprep.subr.mxu0 0.0
  %64 = vmatpush1.msra.mxu0 0.0
  %65 = vmatprep.subr.mxu0 0.0
  %66 = vmatpush1.msra.mxu0 0.0
  %67 = vmatprep.subr.mxu0 0.0
  %68 = vmatpush1.msra.mxu0 0.0
  %69 = vmatprep.subr.mxu0 0.0
  %70 = vmatpush1.msra.mxu0 0.0
  %71 = vmatprep.subr.mxu0 0.0
  %72 = vmatpush1.msra.mxu0 0.0
  %73 = vmatprep.subr.mxu0 0.0
  %74 = vmatpush1.msra.mxu0 0.0
  %75 = vmatprep.subr.mxu0 0.0
  %76 = vmatpush1.msra.mxu0 0.0
  %77 = vmatprep.subr.mxu0 0.0
  %78 = vmatpush1.msra.mxu0 %v55
  %79 = vmatprep.subr.mxu0 0.0
  %80 = vmatpush1.msra.mxu0 %v54
  %81 = vmatprep.subr.mxu0 0.0
  %82 = vmatpush1.msra.mxu0 %v53
  %83 = vmatprep.subr.mxu0 0.0
  %84 = vmatpush1.msra.mxu0 %v52
  %85 = vmatprep.subr.mxu0 0.0
  %86 = vmatpush1.msra.mxu0 %v51
  %87 = vmatprep.subr.mxu0 0.0
  %88 = vmatpush1.msra.mxu0 %v50
  %89 = vmatprep.subr.mxu0 0.0
  %90 = vmatpush1.msra.mxu0 %v49
  %91 = vmatprep.subr.mxu0 0.0
  %92 = vmatpush1.msra.mxu0 %v48
  %93 = vmatprep.subr.mxu0 0.0
  %94 = vmatpush2.msra.mxu0 0.0
  %95 = vmatprep.subr.mxu0 0.0
  %96 = vmatpush2.msra.mxu0 0.0
  %97 = vmatprep.subr.mxu0 0.0
  %98 = vmatpush2.msra.mxu0 0.0
  %99 = vmatprep.subr.mxu0 0.0
  %100 = vmatpush2.msra.mxu0 0.0
  %101 = vmatprep.subr.mxu0 0.0
  %102 = vmatpush2.msra.mxu0 0.0
  %103 = vmatprep.subr.mxu0 0.0
  %104 = vmatpush2.msra.mxu0 0.0
  %105 = vmatprep.subr.mxu0 0.0
  %106 = vmatpush2.msra.mxu0 0.0
  %107 = vmatprep.subr.mxu0 0.0
  %108 = vmatpush2.msra.mxu0 0.0
  %109 = vmatprep.subr.mxu0 0.0
  %110 = vmatpush2.msra.mxu0 0.0
  %111 = vmatprep.subr.mxu0 0.0
  %112 = vmatpush2.msra.mxu0 0.0
  %113 = vmatprep.subr.mxu0 0.0
  %114 = vmatpush2.msra.mxu0 0.0
  %115 = vmatprep.subr.mxu0 0.0
  %116 = vmatpush2.msra.mxu0 0.0
  %117 = vmatprep.subr.mxu0 0.0
  %118 = vmatpush2.msra.mxu0 0.0
  %119 = vmatprep.subr.mxu0 0.0
  %120 = vmatpush2.msra.mxu0 0.0
  %121 = vmatprep.subr.mxu0 0.0
  %122 = vmatpush2.msra.mxu0 0.0
  %123 = vmatprep.subr.mxu0 0.0
  %124 = vmatpush2.msra.mxu0 0.0
  %125 = vmatprep.mubr.f32.mxu0 0.0
  %126 = vmatmul.mubr.f32.gmra.mxu0 %v59
  %v127 = vpop.f32.mrf.mxu0
  %v128 = vadd.f32 %v56, %v127
  %v129 = vpop.f32.mrf.mxu0
  %130 = vdwg.mxu0
  %v131 = vld [vmem:[%s3] sm:$0xff]
  %v132 = vld [vmem:[%s3 + $0x8] sm:$0xff]
  %v133 = vld [vmem:[%s3 + $0x10] sm:$0xff]
  %v134 = vld [vmem:[%s3 + $0x18] sm:$0xff]
  %v135 = vld [vmem:[%s3 + $0x20] sm:$0xff]
  %v136 = vld [vmem:[%s3 + $0x28] sm:$0xff]
  %v137 = vld [vmem:[%s3 + $0x30] sm:$0xff]
  %v138 = vld [vmem:[%s3 + $0x38] sm:$0xff]
  %v139 = vld [vmem:[%s7 + $0x8] sm:$0xff]
  %v141 = vsel %vm57, %v29, 0
  %143 = vmatprep.subr.mxu0 0.0
  %144 = vmatpush1.msra.mxu0 0.0
  %145 = vmatprep.subr.mxu0 0.0
  %146 = vmatpush1.msra.mxu0 0.0
  %147 = vmatprep.subr.mxu0 0.0
  %148 = vmatpush1.msra.mxu0 0.0
  %149 = vmatprep.subr.mxu0 0.0
  %150 = vmatpush1.msra.mxu0 0.0
  %151 = vmatprep.subr.mxu0 0.0
  %152 = vmatpush1.msra.mxu0 0.0
  %153 = vmatprep.subr.mxu0 0.0
  %154 = vmatpush1.msra.mxu0 0.0
  %155 = vmatprep.subr.mxu0 0.0
  %156 = vmatpush1.msra.mxu0 0.0
  %157 = vmatprep.subr.mxu0 0.0
  %158 = vmatpush1.msra.mxu0 0.0
  %159 = vmatprep.subr.mxu0 0.0
  %160 = vmatpush1.msra.mxu0 %v138
  %161 = vmatprep.subr.mxu0 0.0
  %162 = vmatpush1.msra.mxu0 %v137
  %163 = vmatprep.subr.mxu0 0.0
  %164 = vmatpush1.msra.mxu0 %v136
  %165 = vmatprep.subr.mxu0 0.0
  %166 = vmatpush1.msra.mxu0 %v135
  %167 = vmatprep.subr.mxu0 0.0
  %168 = vmatpush1.msra.mxu0 %v134
  %169 = vmatprep.subr.mxu0 0.0
  %170 = vmatpush1.msra.mxu0 %v133
  %171 = vmatprep.subr.mxu0 0.0
  %172 = vmatpush1.msra.mxu0 %v132
  %173 = vmatprep.subr.mxu0 0.0
  %174 = vmatpush1.msra.mxu0 %v131
  %175 = vmatprep.subr.mxu0 0.0
  %176 = vmatpush2.msra.mxu0 0.0
  %177 = vmatprep.subr.mxu0 0.0
  %178 = vmatpush2.msra.mxu0 0.0
  %179 = vmatprep.subr.mxu0 0.0
  %180 = vmatpush2.msra.mxu0 0.0
  %181 = vmatprep.subr.mxu0 0.0
  %182 = vmatpush2.msra.mxu0 0.0
  %183 = vmatprep.subr.mxu0 0.0
  %184 = vmatpush2.msra.mxu0 0.0
  %185 = vmatprep.subr.mxu0 0.0
  %186 = vmatpush2.msra.mxu0 0.0
  %187 = vmatprep.subr.mxu0 0.0
  %188 = vmatpush2.msra.mxu0 0.0
  %189 = vmatprep.subr.mxu0 0.0
  %190 = vmatpush2.msra.mxu0 0.0
  %191 = vmatprep.subr.mxu0 0.0
  %192 = vmatpush2.msra.mxu0 0.0
  %193 = vmatprep.subr.mxu0 0.0
  %194 = vmatpush2.msra.mxu0 0.0
  %195 = vmatprep.subr.mxu0 0.0
  %196 = vmatpush2.msra.mxu0 0.0
  %197 = vmatprep.subr.mxu0 0.0
  %198 = vmatpush2.msra.mxu0 0.0
  %199 = vmatprep.subr.mxu0 0.0
  %200 = vmatpush2.msra.mxu0 0.0
  %201 = vmatprep.subr.mxu0 0.0
  %202 = vmatpush2.msra.mxu0 0.0
  %203 = vmatprep.subr.mxu0 0.0
  %204 = vmatpush2.msra.mxu0 0.0
  %205 = vmatprep.subr.mxu0 0.0
  %206 = vmatpush2.msra.mxu0 0.0
  %207 = vmatprep.mubr.f32.mxu0 0.0
  %208 = vmatmul.mubr.f32.gmra.mxu0 %v141
  %v209 = vpop.f32.mrf.mxu0
  %v210 = vadd.f32 %v139, %v209
  %v211 = vpop.f32.mrf.mxu0
  %212 = vdwg.mxu0
  %214 = vrot.lane.b32.xlu0 %v128, 64
  %v215 = vpop.permute.xlu0 %214
  %v217 = vmul.f32 %v32, %v215
  %v218 = vmul.f32 %v33, %v215
  %v219 = vmul.f32 %v34, %v215
  %v220 = vmul.f32 %v35, %v215
  %v221 = vmul.f32 %v36, %v215
  %v222 = vmul.f32 %v37, %v215
  %v223 = vmul.f32 %v38, %v215
  %v224 = vmul.f32 %v39, %v215
  %v225 = vmul.f32 %v32, %v210
  %v226 = vmul.f32 %v33, %v210
  %v227 = vmul.f32 %v34, %v210
  %v228 = vmul.f32 %v35, %v210
  %v229 = vmul.f32 %v36, %v210
  %v230 = vmul.f32 %v37, %v210
  %v231 = vmul.f32 %v38, %v210
  %v232 = vmul.f32 %v39, %v210
  %v233 = vsel %vm57, %v128, 0
  %v236 = vsel %vm57, %v217, 0
  %v239 = vsel %vm57, %v218, 0
  %v242 = vsel %vm57, %v219, 0
  %v245 = vsel %vm57, %v220, 0
  %v248 = vsel %vm57, %v221, 0
  %v251 = vsel %vm57, %v222, 0
  %v254 = vsel %vm57, %v223, 0
  %v257 = vsel %vm57, %v224, 0
  %259 = vmatprep.subr.mxu0 0.0
  %260 = vmatpush1.xpose.msra.mxu0 0.0
  %261 = vmatprep.subr.mxu0 0.0
  %262 = vmatpush1.xpose.msra.mxu0 0.0
  %263 = vmatprep.subr.mxu0 0.0
  %264 = vmatpush1.xpose.msra.mxu0 0.0
  %265 = vmatprep.subr.mxu0 0.0
  %266 = vmatpush1.xpose.msra.mxu0 0.0
  %267 = vmatprep.subr.mxu0 0.0
  %268 = vmatpush1.xpose.msra.mxu0 0.0
  %269 = vmatprep.subr.mxu0 0.0
  %270 = vmatpush1.xpose.msra.mxu0 0.0
  %271 = vmatprep.subr.mxu0 0.0
  %272 = vmatpush1.xpose.msra.mxu0 0.0
  %273 = vmatprep.subr.mxu0 0.0
  %274 = vmatpush1.xpose.msra.mxu0 0.0
  %275 = vmatprep.subr.mxu0 0.0
  %276 = vmatpush1.xpose.msra.mxu0 %v257
  %277 = vmatprep.subr.mxu0 0.0
  %278 = vmatpush1.xpose.msra.mxu0 %v254
  %279 = vmatprep.subr.mxu0 0.0
  %280 = vmatpush1.xpose.msra.mxu0 %v251
  %281 = vmatprep.subr.mxu0 0.0
  %282 = vmatpush1.xpose.msra.mxu0 %v248
  %283 = vmatprep.subr.mxu0 0.0
  %284 = vmatpush1.xpose.msra.mxu0 %v245
  %285 = vmatprep.subr.mxu0 0.0
  %286 = vmatpush1.xpose.msra.mxu0 %v242
  %287 = vmatprep.subr.mxu0 0.0
  %288 = vmatpush1.xpose.msra.mxu0 %v239
  %289 = vmatprep.subr.mxu0 0.0
  %290 = vmatpush1.xpose.msra.mxu0 %v236
  %291 = vmatprep.subr.mxu0 0.0
  %292 = vmatpush2.xpose.msra.mxu0 0.0
  %293 = vmatprep.subr.mxu0 0.0
  %294 = vmatpush2.xpose.msra.mxu0 0.0
  %295 = vmatprep.subr.mxu0 0.0
  %296 = vmatpush2.xpose.msra.mxu0 0.0
  %297 = vmatprep.subr.mxu0 0.0
  %298 = vmatpush2.xpose.msra.mxu0 0.0
  %299 = vmatprep.subr.mxu0 0.0
  %300 = vmatpush2.xpose.msra.mxu0 0.0
  %301 = vmatprep.subr.mxu0 0.0
  %302 = vmatpush2.xpose.msra.mxu0 0.0
  %303 = vmatprep.subr.mxu0 0.0
  %304 = vmatpush2.xpose.msra.mxu0 0.0
  %305 = vmatprep.subr.mxu0 0.0
  %306 = vmatpush2.xpose.msra.mxu0 0.0
  %307 = vmatprep.subr.mxu0 0.0
  %308 = vmatpush2.xpose.msra.mxu0 0.0
  %309 = vmatprep.subr.mxu0 0.0
  %310 = vmatpush2.xpose.msra.mxu0 0.0
  %311 = vmatprep.subr.mxu0 0.0
  %312 = vmatpush2.xpose.msra.mxu0 0.0
  %313 = vmatprep.subr.mxu0 0.0
  %314 = vmatpush2.xpose.msra.mxu0 0.0
  %315 = vmatprep.subr.mxu0 0.0
  %316 = vmatpush2.xpose.msra.mxu0 0.0
  %317 = vmatprep.subr.mxu0 0.0
  %318 = vmatpush2.xpose.msra.mxu0 0.0
  %319 = vmatprep.subr.mxu0 0.0
  %320 = vmatpush2.xpose.msra.mxu0 0.0
  %321 = vmatprep.subr.mxu0 0.0
  %322 = vmatpush2.xpose.msra.mxu0 0.0
  %323 = vmatprep.mubr.f32.mxu0 0.0
  %324 = vmatmul.mubr.f32.gmra.mxu0 %v233
  %v325 = vpop.f32.mrf.mxu0
  %v326 = vadd.f32 0.0, %v325
  %v327 = vpop.f32.mrf.mxu0
  %328 = vdwg.mxu0
  %v329 = vsel %vm57, %v326, -inf
  %330 = vmax.xlane.f32.xlu0 %v329
  %v331 = vpop.xlane.xlu0 %330
  %v332 = vsub.f32 %v326, %v331
  %v333 = vmul.f32 %v332, 1.442695
  %v334 = vpow.pop %v333
  %v336 = vsel %vm57, %v334, 0
  %338 = vmatprep.subr.mxu0 0.0
  %339 = vmatpush1.msra.mxu0 0.0
  %340 = vmatprep.subr.mxu0 0.0
  %341 = vmatpush1.msra.mxu0 0.0
  %342 = vmatprep.subr.mxu0 0.0
  %343 = vmatpush1.msra.mxu0 0.0
  %344 = vmatprep.subr.mxu0 0.0
  %345 = vmatpush1.msra.mxu0 0.0
  %346 = vmatprep.subr.mxu0 0.0
  %347 = vmatpush1.msra.mxu0 0.0
  %348 = vmatprep.subr.mxu0 0.0
  %349 = vmatpush1.msra.mxu0 0.0
  %350 = vmatprep.subr.mxu0 0.0
  %351 = vmatpush1.msra.mxu0 0.0
  %352 = vmatprep.subr.mxu0 0.0
  %353 = vmatpush1.msra.mxu0 0.0
  %354 = vmatprep.subr.mxu0 0.0
  %355 = vmatpush1.msra.mxu0 %v232
  %356 = vmatprep.subr.mxu0 0.0
  %357 = vmatpush1.msra.mxu0 %v231
  %358 = vmatprep.subr.mxu0 0.0
  %359 = vmatpush1.msra.mxu0 %v230
  %360 = vmatprep.subr.mxu0 0.0
  %361 = vmatpush1.msra.mxu0 %v229
  %362 = vmatprep.subr.mxu0 0.0
  %363 = vmatpush1.msra.mxu0 %v228
  %364 = vmatprep.subr.mxu0 0.0
  %365 = vmatpush1.msra.mxu0 %v227
  %366 = vmatprep.subr.mxu0 0.0
  %367 = vmatpush1.msra.mxu0 %v226
  %368 = vmatprep.subr.mxu0 0.0
  %369 = vmatpush1.msra.mxu0 %v225
  %370 = vmatprep.subr.mxu0 0.0
  %371 = vmatpush2.msra.mxu0 0.0
  %372 = vmatprep.subr.mxu0 0.0
  %373 = vmatpush2.msra.mxu0 0.0
  %374 = vmatprep.subr.mxu0 0.0
  %375 = vmatpush2.msra.mxu0 0.0
  %376 = vmatprep.subr.mxu0 0.0
  %377 = vmatpush2.msra.mxu0 0.0
  %378 = vmatprep.subr.mxu0 0.0
  %379 = vmatpush2.msra.mxu0 0.0
  %380 = vmatprep.subr.mxu0 0.0
  %381 = vmatpush2.msra.mxu0 0.0
  %382 = vmatprep.subr.mxu0 0.0
  %383 = vmatpush2.msra.mxu0 0.0
  %384 = vmatprep.subr.mxu0 0.0
  %385 = vmatpush2.msra.mxu0 0.0
  %386 = vmatprep.subr.mxu0 0.0
  %387 = vmatpush2.msra.mxu0 0.0
  %388 = vmatprep.subr.mxu0 0.0
  %389 = vmatpush2.msra.mxu0 0.0
  %390 = vmatprep.subr.mxu0 0.0
  %391 = vmatpush2.msra.mxu0 0.0
  %392 = vmatprep.subr.mxu0 0.0
  %393 = vmatpush2.msra.mxu0 0.0
  %394 = vmatprep.subr.mxu0 0.0
  %395 = vmatpush2.msra.mxu0 0.0
  %396 = vmatprep.subr.mxu0 0.0
  %397 = vmatpush2.msra.mxu0 0.0
  %398 = vmatprep.subr.mxu0 0.0
  %399 = vmatpush2.msra.mxu0 0.0
  %400 = vmatprep.subr.mxu0 0.0
  %401 = vmatpush2.msra.mxu0 0.0
  %402 = vmatprep.mubr.f32.mxu0 0.0
  %403 = vmatmul.mubr.f32.gmra.mxu0 %v336
  %v404 = vpop.f32.mrf.mxu0
  %v405 = vadd.f32 0.0, %v404
  %v406 = vpop.f32.mrf.mxu0
  %407 = vdwg.mxu0
  %408 = vmatprep.subr.mxu0 0.0
  %409 = vmatpush1.msra.mxu0 0.0
  %410 = vmatprep.subr.mxu0 0.0
  %411 = vmatpush1.msra.mxu0 0.0
  %412 = vmatprep.subr.mxu0 0.0
  %413 = vmatpush1.msra.mxu0 0.0
  %414 = vmatprep.subr.mxu0 0.0
  %415 = vmatpush1.msra.mxu0 0.0
  %416 = vmatprep.subr.mxu0 0.0
  %417 = vmatpush1.msra.mxu0 0.0
  %418 = vmatprep.subr.mxu0 0.0
  %419 = vmatpush1.msra.mxu0 0.0
  %420 = vmatprep.subr.mxu0 0.0
  %421 = vmatpush1.msra.mxu0 0.0
  %422 = vmatprep.subr.mxu0 0.0
  %423 = vmatpush1.msra.mxu0 0.0
  %424 = vmatprep.subr.mxu0 0.0
  %425 = vmatpush1.msra.mxu0 %v39
  %426 = vmatprep.subr.mxu0 0.0
  %427 = vmatpush1.msra.mxu0 %v38
  %428 = vmatprep.subr.mxu0 0.0
  %429 = vmatpush1.msra.mxu0 %v37
  %430 = vmatprep.subr.mxu0 0.0
  %431 = vmatpush1.msra.mxu0 %v36
  %432 = vmatprep.subr.mxu0 0.0
  %433 = vmatpush1.msra.mxu0 %v35
  %434 = vmatprep.subr.mxu0 0.0
  %435 = vmatpush1.msra.mxu0 %v34
  %436 = vmatprep.subr.mxu0 0.0
  %437 = vmatpush1.msra.mxu0 %v33
  %438 = vmatprep.subr.mxu0 0.0
  %439 = vmatpush1.msra.mxu0 %v32
  %440 = vmatprep.subr.mxu0 0.0
  %441 = vmatpush2.msra.mxu0 0.0
  %442 = vmatprep.subr.mxu0 0.0
  %443 = vmatpush2.msra.mxu0 0.0
  %444 = vmatprep.subr.mxu0 0.0
  %445 = vmatpush2.msra.mxu0 0.0
  %446 = vmatprep.subr.mxu0 0.0
  %447 = vmatpush2.msra.mxu0 0.0
  %448 = vmatprep.subr.mxu0 0.0
  %449 = vmatpush2.msra.mxu0 0.0
  %450 = vmatprep.subr.mxu0 0.0
  %451 = vmatpush2.msra.mxu0 0.0
  %452 = vmatprep.subr.mxu0 0.0
  %453 = vmatpush2.msra.mxu0 0.0
  %454 = vmatprep.subr.mxu0 0.0
  %455 = vmatpush2.msra.mxu0 0.0
  %456 = vmatprep.subr.mxu0 0.0
  %457 = vmatpush2.msra.mxu0 0.0
  %458 = vmatprep.subr.mxu0 0.0
  %459 = vmatpush2.msra.mxu0 0.0
  %460 = vmatprep.subr.mxu0 0.0
  %461 = vmatpush2.msra.mxu0 0.0
  %462 = vmatprep.subr.mxu0 0.0
  %463 = vmatpush2.msra.mxu0 0.0
  %464 = vmatprep.subr.mxu0 0.0
  %465 = vmatpush2.msra.mxu0 0.0
  %466 = vmatprep.subr.mxu0 0.0
  %467 = vmatpush2.msra.mxu0 0.0
  %468 = vmatprep.subr.mxu0 0.0
  %469 = vmatpush2.msra.mxu0 0.0
  %470 = vmatprep.subr.mxu0 0.0
  %471 = vmatpush2.msra.mxu0 0.0
  %472 = vmatprep.mubr.f32.mxu0 0.0
  %473 = vmatmul.mubr.f32.gmra.mxu0 %v336
  %v474 = vpop.f32.mrf.mxu0
  %v475 = vadd.f32 0.0, %v474
  %v476 = vpop.f32.mrf.mxu0
  %477 = vdwg.mxu0
  %v478 = vmax.f32 %v475, 1e-37
  %v479 = vrcp.pop %v478
  %v480 = vmul.f32 %v405, %v479
  %v481 = vld [vmem:[%s3 + $0x40] sm:$0xff]
  %v482 = vld [vmem:[%s3 + $0x48] sm:$0xff]
  %v483 = vld [vmem:[%s3 + $0x50] sm:$0xff]
  %v484 = vld [vmem:[%s3 + $0x58] sm:$0xff]
  %v485 = vld [vmem:[%s3 + $0x60] sm:$0xff]
  %v486 = vld [vmem:[%s3 + $0x68] sm:$0xff]
  %v487 = vld [vmem:[%s3 + $0x70] sm:$0xff]
  %v488 = vld [vmem:[%s3 + $0x78] sm:$0xff]
  %v489 = vld [vmem:[%s7 + $0x10] sm:$0xff]
  %v491 = vsel %vm57, %v480, 0
  %493 = vmatprep.subr.mxu0 0.0
  %494 = vmatpush1.msra.mxu0 0.0
  %495 = vmatprep.subr.mxu0 0.0
  %496 = vmatpush1.msra.mxu0 0.0
  %497 = vmatprep.subr.mxu0 0.0
  %498 = vmatpush1.msra.mxu0 0.0
  %499 = vmatprep.subr.mxu0 0.0
  %500 = vmatpush1.msra.mxu0 0.0
  %501 = vmatprep.subr.mxu0 0.0
  %502 = vmatpush1.msra.mxu0 0.0
  %503 = vmatprep.subr.mxu0 0.0
  %504 = vmatpush1.msra.mxu0 0.0
  %505 = vmatprep.subr.mxu0 0.0
  %506 = vmatpush1.msra.mxu0 0.0
  %507 = vmatprep.subr.mxu0 0.0
  %508 = vmatpush1.msra.mxu0 0.0
  %509 = vmatprep.subr.mxu0 0.0
  %510 = vmatpush1.msra.mxu0 %v488
  %511 = vmatprep.subr.mxu0 0.0
  %512 = vmatpush1.msra.mxu0 %v487
  %513 = vmatprep.subr.mxu0 0.0
  %514 = vmatpush1.msra.mxu0 %v486
  %515 = vmatprep.subr.mxu0 0.0
  %516 = vmatpush1.msra.mxu0 %v485
  %517 = vmatprep.subr.mxu0 0.0
  %518 = vmatpush1.msra.mxu0 %v484
  %519 = vmatprep.subr.mxu0 0.0
  %520 = vmatpush1.msra.mxu0 %v483
  %521 = vmatprep.subr.mxu0 0.0
  %522 = vmatpush1.msra.mxu0 %v482
  %523 = vmatprep.subr.mxu0 0.0
  %524 = vmatpush1.msra.mxu0 %v481
  %525 = vmatprep.subr.mxu0 0.0
  %526 = vmatpush2.msra.mxu0 0.0
  %527 = vmatprep.subr.mxu0 0.0
  %528 = vmatpush2.msra.mxu0 0.0
  %529 = vmatprep.subr.mxu0 0.0
  %530 = vmatpush2.msra.mxu0 0.0
  %531 = vmatprep.subr.mxu0 0.0
  %532 = vmatpush2.msra.mxu0 0.0
  %533 = vmatprep.subr.mxu0 0.0
  %534 = vmatpush2.msra.mxu0 0.0
  %535 = vmatprep.subr.mxu0 0.0
  %536 = vmatpush2.msra.mxu0 0.0
  %537 = vmatprep.subr.mxu0 0.0
  %538 = vmatpush2.msra.mxu0 0.0
  %539 = vmatprep.subr.mxu0 0.0
  %540 = vmatpush2.msra.mxu0 0.0
  %541 = vmatprep.subr.mxu0 0.0
  %542 = vmatpush2.msra.mxu0 0.0
  %543 = vmatprep.subr.mxu0 0.0
  %544 = vmatpush2.msra.mxu0 0.0
  %545 = vmatprep.subr.mxu0 0.0
  %546 = vmatpush2.msra.mxu0 0.0
  %547 = vmatprep.subr.mxu0 0.0
  %548 = vmatpush2.msra.mxu0 0.0
  %549 = vmatprep.subr.mxu0 0.0
  %550 = vmatpush2.msra.mxu0 0.0
  %551 = vmatprep.subr.mxu0 0.0
  %552 = vmatpush2.msra.mxu0 0.0
  %553 = vmatprep.subr.mxu0 0.0
  %554 = vmatpush2.msra.mxu0 0.0
  %555 = vmatprep.subr.mxu0 0.0
  %556 = vmatpush2.msra.mxu0 0.0
  %557 = vmatprep.mubr.f32.mxu0 0.0
  %558 = vmatmul.mubr.f32.gmra.mxu0 %v491
  %v559 = vpop.f32.mrf.mxu0
  %v560 = vadd.f32 %v489, %v559
  %v561 = vpop.f32.mrf.mxu0
  %562 = vdwg.mxu0
  %v563 = vadd.f32 %v29, %v560
  %v565 = vsel %vm57, %v563, 0
  %567 = vmatprep.subr.mxu0 0.0
  %568 = vmatpush1.msra.mxu0 0.0
  %569 = vmatprep.subr.mxu0 0.0
  %570 = vmatpush1.msra.mxu0 0.0
  %571 = vmatprep.subr.mxu0 0.0
  %572 = vmatpush1.msra.mxu0 0.0
  %573 = vmatprep.subr.mxu0 0.0
  %574 = vmatpush1.msra.mxu0 0.0
  %575 = vmatprep.subr.mxu0 0.0
  %576 = vmatpush1.msra.mxu0 0.0
  %577 = vmatprep.subr.mxu0 0.0
  %578 = vmatpush1.msra.mxu0 0.0
  %579 = vmatprep.subr.mxu0 0.0
  %580 = vmatpush1.msra.mxu0 0.0
  %581 = vmatprep.subr.mxu0 0.0
  %582 = vmatpush1.msra.mxu0 0.0
  %583 = vmatprep.subr.mxu0 0.0
  %584 = vmatpush1.msra.mxu0 %v47
  %585 = vmatprep.subr.mxu0 0.0
  %586 = vmatpush1.msra.mxu0 %v46
  %587 = vmatprep.subr.mxu0 0.0
  %588 = vmatpush1.msra.mxu0 %v45
  %589 = vmatprep.subr.mxu0 0.0
  %590 = vmatpush1.msra.mxu0 %v44
  %591 = vmatprep.subr.mxu0 0.0
  %592 = vmatpush1.msra.mxu0 %v43
  %593 = vmatprep.subr.mxu0 0.0
  %594 = vmatpush1.msra.mxu0 %v42
  %595 = vmatprep.subr.mxu0 0.0
  %596 = vmatpush1.msra.mxu0 %v41
  %597 = vmatprep.subr.mxu0 0.0
  %598 = vmatpush1.msra.mxu0 %v40
  %599 = vmatprep.subr.mxu0 0.0
  %600 = vmatpush2.msra.mxu0 0.0
  %601 = vmatprep.subr.mxu0 0.0
  %602 = vmatpush2.msra.mxu0 0.0
  %603 = vmatprep.subr.mxu0 0.0
  %604 = vmatpush2.msra.mxu0 0.0
  %605 = vmatprep.subr.mxu0 0.0
  %606 = vmatpush2.msra.mxu0 0.0
  %607 = vmatprep.subr.mxu0 0.0
  %608 = vmatpush2.msra.mxu0 0.0
  %609 = vmatprep.subr.mxu0 0.0
  %610 = vmatpush2.msra.mxu0 0.0
  %611 = vmatprep.subr.mxu0 0.0
  %612 = vmatpush2.msra.mxu0 0.0
  %613 = vmatprep.subr.mxu0 0.0
  %614 = vmatpush2.msra.mxu0 0.0
  %615 = vmatprep.subr.mxu0 0.0
  %616 = vmatpush2.msra.mxu0 0.0
  %617 = vmatprep.subr.mxu0 0.0
  %618 = vmatpush2.msra.mxu0 0.0
  %619 = vmatprep.subr.mxu0 0.0
  %620 = vmatpush2.msra.mxu0 0.0
  %621 = vmatprep.subr.mxu0 0.0
  %622 = vmatpush2.msra.mxu0 0.0
  %623 = vmatprep.subr.mxu0 0.0
  %624 = vmatpush2.msra.mxu0 0.0
  %625 = vmatprep.subr.mxu0 0.0
  %626 = vmatpush2.msra.mxu0 0.0
  %627 = vmatprep.subr.mxu0 0.0
  %628 = vmatpush2.msra.mxu0 0.0
  %629 = vmatprep.subr.mxu0 0.0
  %630 = vmatpush2.msra.mxu0 0.0
  %631 = vmatprep.mubr.f32.mxu0 0.0
  %632 = vmatmul.mubr.f32.gmra.mxu0 %v565
  %v633 = vpop.f32.mrf.mxu0
  %v634 = vadd.f32 0.0, %v633
  %v635 = vpop.f32.mrf.mxu0
  %636 = vdwg.mxu0
  %v637 = vmul.f32 %v563, %v563
  %v639 = vsel %vm57, %v637, 0
  %641 = vmatprep.subr.mxu0 0.0
  %642 = vmatpush1.msra.mxu0 0.0
  %643 = vmatprep.subr.mxu0 0.0
  %644 = vmatpush1.msra.mxu0 0.0
  %645 = vmatprep.subr.mxu0 0.0
  %646 = vmatpush1.msra.mxu0 0.0
  %647 = vmatprep.subr.mxu0 0.0
  %648 = vmatpush1.msra.mxu0 0.0
  %649 = vmatprep.subr.mxu0 0.0
  %650 = vmatpush1.msra.mxu0 0.0
  %651 = vmatprep.subr.mxu0 0.0
  %652 = vmatpush1.msra.mxu0 0.0
  %653 = vmatprep.subr.mxu0 0.0
  %654 = vmatpush1.msra.mxu0 0.0
  %655 = vmatprep.subr.mxu0 0.0
  %656 = vmatpush1.msra.mxu0 0.0
  %657 = vmatprep.subr.mxu0 0.0
  %658 = vmatpush1.msra.mxu0 %v47
  %659 = vmatprep.subr.mxu0 0.0
  %660 = vmatpush1.msra.mxu0 %v46
  %661 = vmatprep.subr.mxu0 0.0
  %662 = vmatpush1.msra.mxu0 %v45
  %663 = vmatprep.subr.mxu0 0.0
  %664 = vmatpush1.msra.mxu0 %v44
  %665 = vmatprep.subr.mxu0 0.0
  %666 = vmatpush1.msra.mxu0 %v43
  %667 = vmatprep.subr.mxu0 0.0
  %668 = vmatpush1.msra.mxu0 %v42
  %669 = vmatprep.subr.mxu0 0.0
  %670 = vmatpush1.msra.mxu0 %v41
  %671 = vmatprep.subr.mxu0 0.0
  %672 = vmatpush1.msra.mxu0 %v40
  %673 = vmatprep.subr.mxu0 0.0
  %674 = vmatpush2.msra.mxu0 0.0
  %675 = vmatprep.subr.mxu0 0.0
  %676 = vmatpush2.msra.mxu0 0.0
  %677 = vmatprep.subr.mxu0 0.0
  %678 = vmatpush2.msra.mxu0 0.0
  %679 = vmatprep.subr.mxu0 0.0
  %680 = vmatpush2.msra.mxu0 0.0
  %681 = vmatprep.subr.mxu0 0.0
  %682 = vmatpush2.msra.mxu0 0.0
  %683 = vmatprep.subr.mxu0 0.0
  %684 = vmatpush2.msra.mxu0 0.0
  %685 = vmatprep.subr.mxu0 0.0
  %686 = vmatpush2.msra.mxu0 0.0
  %687 = vmatprep.subr.mxu0 0.0
  %688 = vmatpush2.msra.mxu0 0.0
  %689 = vmatprep.subr.mxu0 0.0
  %690 = vmatpush2.msra.mxu0 0.0
  %691 = vmatprep.subr.mxu0 0.0
  %692 = vmatpush2.msra.mxu0 0.0
  %693 = vmatprep.subr.mxu0 0.0
  %694 = vmatpush2.msra.mxu0 0.0
  %695 = vmatprep.subr.mxu0 0.0
  %696 = vmatpush2.msra.mxu0 0.0
  %697 = vmatprep.subr.mxu0 0.0
  %698 = vmatpush2.msra.mxu0 0.0
  %699 = vmatprep.subr.mxu0 0.0
  %700 = vmatpush2.msra.mxu0 0.0
  %701 = vmatprep.subr.mxu0 0.0
  %702 = vmatpush2.msra.mxu0 0.0
  %703 = vmatprep.subr.mxu0 0.0
  %704 = vmatpush2.msra.mxu0 0.0
  %705 = vmatprep.mubr.f32.mxu0 0.0
  %706 = vmatmul.mubr.f32.gmra.mxu0 %v639
  %v707 = vpop.f32.mrf.mxu0
  %v708 = vadd.f32 0.0, %v707
  %v709 = vpop.f32.mrf.mxu0
  %710 = vdwg.mxu0
  %v711 = vsub.f32 %v563, %v634
  %v712 = vmul.f32 %v634, %v634
  %v713 = vsub.f32 %v708, %v712
  %v714 = vadd.f32 %v713, 1e-05
  %v715 = vrsqrt.pop %v714
  %v716 = vmul.f32 %v711, %v715
  %v717 = vld [vmem:[%s7 + $0x28] sm:$0xff]
  %v718 = vmul.f32 %v716, %v717
  %v719 = vld [vmem:[%s7 + $0x30] sm:$0xff]
  %v720 = vadd.f32 %v718, %v719
  %v721 = vld [vmem:[%s4] sm:$0xff]
  %v722 = vld [vmem:[%s4 + $0x8] sm:$0xff]
  %v723 = vld [vmem:[%s4 + $0x10] sm:$0xff]
  %v724 = vld [vmem:[%s4 + $0x18] sm:$0xff]
  %v725 = vld [vmem:[%s4 + $0x20] sm:$0xff]
  %v726 = vld [vmem:[%s4 + $0x28] sm:$0xff]
  %v727 = vld [vmem:[%s4 + $0x30] sm:$0xff]
  %v728 = vld [vmem:[%s4 + $0x38] sm:$0xff]
  %v729 = vld [vmem:[%s7 + $0x18] sm:$0xff]
  %v731 = vsel %vm57, %v720, 0
  %733 = vmatprep.subr.mxu0 0.0
  %734 = vmatpush1.msra.mxu0 0.0
  %735 = vmatprep.subr.mxu0 0.0
  %736 = vmatpush1.msra.mxu0 0.0
  %737 = vmatprep.subr.mxu0 0.0
  %738 = vmatpush1.msra.mxu0 0.0
  %739 = vmatprep.subr.mxu0 0.0
  %740 = vmatpush1.msra.mxu0 0.0
  %741 = vmatprep.subr.mxu0 0.0
  %742 = vmatpush1.msra.mxu0 0.0
  %743 = vmatprep.subr.mxu0 0.0
  %744 = vmatpush1.msra.mxu0 0.0
  %745 = vmatprep.subr.mxu0 0.0
  %746 = vmatpush1.msra.mxu0 0.0
  %747 = vmatprep.subr.mxu0 0.0
  %748 = vmatpush1.msra.mxu0 0.0
  %749 = vmatprep.subr.mxu0 0.0
  %750 = vmatpush1.msra.mxu0 %v728
  %751 = vmatprep.subr.mxu0 0.0
  %752 = vmatpush1.msra.mxu0 %v727
  %753 = vmatprep.subr.mxu0 0.0
  %754 = vmatpush1.msra.mxu0 %v726
  %755 = vmatprep.subr.mxu0 0.0
  %756 = vmatpush1.msra.mxu0 %v725
  %757 = vmatprep.subr.mxu0 0.0
  %758 = vmatpush1.msra.mxu0 %v724
  %759 = vmatprep.subr.mxu0 0.0
  %760 = vmatpush1.msra.mxu0 %v723
  %761 = vmatprep.subr.mxu0 0.0
  %762 = vmatpush1.msra.mxu0 %v722
  %763 = vmatprep.subr.mxu0 0.0
  %764 = vmatpush1.msra.mxu0 %v721
  %765 = vmatprep.subr.mxu0 0.0
  %766 = vmatpush2.msra.mxu0 0.0
  %767 = vmatprep.subr.mxu0 0.0
  %768 = vmatpush2.msra.mxu0 0.0
  %769 = vmatprep.subr.mxu0 0.0
  %770 = vmatpush2.msra.mxu0 0.0
  %771 = vmatprep.subr.mxu0 0.0
  %772 = vmatpush2.msra.mxu0 0.0
  %773 = vmatprep.subr.mxu0 0.0
  %774 = vmatpush2.msra.mxu0 0.0
  %775 = vmatprep.subr.mxu0 0.0
  %776 = vmatpush2.msra.mxu0 0.0
  %777 = vmatprep.subr.mxu0 0.0
  %778 = vmatpush2.msra.mxu0 0.0
  %779 = vmatprep.subr.mxu0 0.0
  %780 = vmatpush2.msra.mxu0 0.0
  %781 = vmatprep.subr.mxu0 0.0
  %782 = vmatpush2.msra.mxu0 0.0
  %783 = vmatprep.subr.mxu0 0.0
  %784 = vmatpush2.msra.mxu0 0.0
  %785 = vmatprep.subr.mxu0 0.0
  %786 = vmatpush2.msra.mxu0 0.0
  %787 = vmatprep.subr.mxu0 0.0
  %788 = vmatpush2.msra.mxu0 0.0
  %789 = vmatprep.subr.mxu0 0.0
  %790 = vmatpush2.msra.mxu0 0.0
  %791 = vmatprep.subr.mxu0 0.0
  %792 = vmatpush2.msra.mxu0 0.0
  %793 = vmatprep.subr.mxu0 0.0
  %794 = vmatpush2.msra.mxu0 0.0
  %795 = vmatprep.subr.mxu0 0.0
  %796 = vmatpush2.msra.mxu0 0.0
  %797 = vmatprep.mubr.f32.mxu0 0.0
  %798 = vmatmul.mubr.f32.gmra.mxu0 %v731
  %v799 = vpop.f32.mrf.mxu0
  %v800 = vadd.f32 %v729, %v799
  %v801 = vpop.f32.mrf.mxu0
  %802 = vdwg.mxu0
  %v803 = vmax.f32 %v800, 0.0
  %v804 = vld [vmem:[%s5] sm:$0xff]
  %v805 = vld [vmem:[%s5 + $0x8] sm:$0xff]
  %v806 = vld [vmem:[%s5 + $0x10] sm:$0xff]
  %v807 = vld [vmem:[%s5 + $0x18] sm:$0xff]
  %v808 = vld [vmem:[%s5 + $0x20] sm:$0xff]
  %v809 = vld [vmem:[%s5 + $0x28] sm:$0xff]
  %v810 = vld [vmem:[%s5 + $0x30] sm:$0xff]
  %v811 = vld [vmem:[%s5 + $0x38] sm:$0xff]
  %v812 = vld [vmem:[%s5 + $0x40] sm:$0xff]
  %v813 = vld [vmem:[%s5 + $0x48] sm:$0xff]
  %v814 = vld [vmem:[%s5 + $0x50] sm:$0xff]
  %v815 = vld [vmem:[%s5 + $0x58] sm:$0xff]
  %v816 = vld [vmem:[%s5 + $0x60] sm:$0xff]
  %v817 = vld [vmem:[%s5 + $0x68] sm:$0xff]
  %v818 = vld [vmem:[%s5 + $0x70] sm:$0xff]
  %v819 = vld [vmem:[%s5 + $0x78] sm:$0xff]
  %v820 = vld [vmem:[%s7 + $0x20] sm:$0xff]
  %821 = vmatprep.subr.mxu0 0.0
  %822 = vmatpush1.msra.mxu0 %v819
  %823 = vmatprep.subr.mxu0 0.0
  %824 = vmatpush1.msra.mxu0 %v818
  %825 = vmatprep.subr.mxu0 0.0
  %826 = vmatpush1.msra.mxu0 %v817
  %827 = vmatprep.subr.mxu0 0.0
  %828 = vmatpush1.msra.mxu0 %v816
  %829 = vmatprep.subr.mxu0 0.0
  %830 = vmatpush1.msra.mxu0 %v815
  %831 = vmatprep.subr.mxu0 0.0
  %832 = vmatpush1.msra.mxu0 %v814
  %833 = vmatprep.subr.mxu0 0.0
  %834 = vmatpush1.msra.mxu0 %v813
  %835 = vmatprep.subr.mxu0 0.0
  %836 = vmatpush1.msra.mxu0 %v812
  %837 = vmatprep.subr.mxu0 0.0
  %838 = vmatpush1.msra.mxu0 %v811
  %839 = vmatprep.subr.mxu0 0.0
  %840 = vmatpush1.msra.mxu0 %v810
  %841 = vmatprep.subr.mxu0 0.0
  %842 = vmatpush1.msra.mxu0 %v809
  %843 = vmatprep.subr.mxu0 0.0
  %844 = vmatpush1.msra.mxu0 %v808
  %845 = vmatprep.subr.mxu0 0.0
  %846 = vmatpush1.msra.mxu0 %v807
  %847 = vmatprep.subr.mxu0 0.0
  %848 = vmatpush1.msra.mxu0 %v806
  %849 = vmatprep.subr.mxu0 0.0
  %850 = vmatpush1.msra.mxu0 %v805
  %851 = vmatprep.subr.mxu0 0.0
  %852 = vmatpush1.msra.mxu0 %v804
  %853 = vmatprep.subr.mxu0 0.0
  %854 = vmatpush2.msra.mxu0 0.0
  %855 = vmatprep.subr.mxu0 0.0
  %856 = vmatpush2.msra.mxu0 0.0
  %857 = vmatprep.subr.mxu0 0.0
  %858 = vmatpush2.msra.mxu0 0.0
  %859 = vmatprep.subr.mxu0 0.0
  %860 = vmatpush2.msra.mxu0 0.0
  %861 = vmatprep.subr.mxu0 0.0
  %862 = vmatpush2.msra.mxu0 0.0
  %863 = vmatprep.subr.mxu0 0.0
  %864 = vmatpush2.msra.mxu0 0.0
  %865 = vmatprep.subr.mxu0 0.0
  %866 = vmatpush2.msra.mxu0 0.0
  %867 = vmatprep.subr.mxu0 0.0
  %868 = vmatpush2.msra.mxu0 0.0
  %869 = vmatprep.subr.mxu0 0.0
  %870 = vmatpush2.msra.mxu0 0.0
  %871 = vmatprep.subr.mxu0 0.0
  %872 = vmatpush2.msra.mxu0 0.0
  %873 = vmatprep.subr.mxu0 0.0
  %874 = vmatpush2.msra.mxu0 0.0
  %875 = vmatprep.subr.mxu0 0.0
  %876 = vmatpush2.msra.mxu0 0.0
  %877 = vmatprep.subr.mxu0 0.0
  %878 = vmatpush2.msra.mxu0 0.0
  %879 = vmatprep.subr.mxu0 0.0
  %880 = vmatpush2.msra.mxu0 0.0
  %881 = vmatprep.subr.mxu0 0.0
  %882 = vmatpush2.msra.mxu0 0.0
  %883 = vmatprep.subr.mxu0 0.0
  %884 = vmatpush2.msra.mxu0 0.0
  %885 = vmatprep.mubr.f32.mxu0 0.0
  %886 = vmatmul.mubr.f32.gmra.mxu0 %v803
  %v887 = vpop.f32.mrf.mxu0
  %v888 = vadd.f32 %v820, %v887
  %v889 = vpop.f32.mrf.mxu0
  %890 = vdwg.mxu0
  %v891 = vadd.f32 %v720, %v888
  %v893 = vsel %vm57, %v891, 0
  %895 = vmatprep.subr.mxu0 0.0
  %896 = vmatpush1.msra.mxu0 0.0
  %897 = vmatprep.subr.mxu0 0.0
  %898 = vmatpush1.msra.mxu0 0.0
  %899 = vmatprep.subr.mxu0 0.0
  %900 = vmatpush1.msra.mxu0 0.0
  %901 = vmatprep.subr.mxu0 0.0
  %902 = vmatpush1.msra.mxu0 0.0
  %903 = vmatprep.subr.mxu0 0.0
  %904 = vmatpush1.msra.mxu0 0.0
  %905 = vmatprep.subr.mxu0 0.0
  %906 = vmatpush1.msra.mxu0 0.0
  %907 = vmatprep.subr.mxu0 0.0
  %908 = vmatpush1.msra.mxu0 0.0
  %909 = vmatprep.subr.mxu0 0.0
  %910 = vmatpush1.msra.mxu0 0.0
  %911 = vmatprep.subr.mxu0 0.0
  %912 = vmatpush1.msra.mxu0 %v47
  %913 = vmatprep.subr.mxu0 0.0
  %914 = vmatpush1.msra.mxu0 %v46
  %915 = vmatprep.subr.mxu0 0.0
  %916 = vmatpush1.msra.mxu0 %v45
  %917 = vmatprep.subr.mxu0 0.0
  %918 = vmatpush1.msra.mxu0 %v44
  %919 = vmatprep.subr.mxu0 0.0
  %920 = vmatpush1.msra.mxu0 %v43
  %921 = vmatprep.subr.mxu0 0.0
  %922 = vmatpush1.msra.mxu0 %v42
  %923 = vmatprep.subr.mxu0 0.0
  %924 = vmatpush1.msra.mxu0 %v41
  %925 = vmatprep.subr.mxu0 0.0
  %926 = vmatpush1.msra.mxu0 %v40
  %927 = vmatprep.subr.mxu0 0.0
  %928 = vmatpush2.msra.mxu0 0.0
  %929 = vmatprep.subr.mxu0 0.0
  %930 = vmatpush2.msra.mxu0 0.0
  %931 = vmatprep.subr.mxu0 0.0
  %932 = vmatpush2.msra.mxu0 0.0
  %933 = vmatprep.subr.mxu0 0.0
  %934 = vmatpush2.msra.mxu0 0.0
  %935 = vmatprep.subr.mxu0 0.0
  %936 = vmatpush2.msra.mxu0 0.0
  %937 = vmatprep.subr.mxu0 0.0
  %938 = vmatpush2.msra.mxu0 0.0
  %939 = vmatprep.subr.mxu0 0.0
  %940 = vmatpush2.msra.mxu0 0.0
  %941 = vmatprep.subr.mxu0 0.0
  %942 = vmatpush2.msra.mxu0 0.0
  %943 = vmatprep.subr.mxu0 0.0
  %944 = vmatpush2.msra.mxu0 0.0
  %945 = vmatprep.subr.mxu0 0.0
  %946 = vmatpush2.msra.mxu0 0.0
  %947 = vmatprep.subr.mxu0 0.0
  %948 = vmatpush2.msra.mxu0 0.0
  %949 = vmatprep.subr.mxu0 0.0
  %950 = vmatpush2.msra.mxu0 0.0
  %951 = vmatprep.subr.mxu0 0.0
  %952 = vmatpush2.msra.mxu0 0.0
  %953 = vmatprep.subr.mxu0 0.0
  %954 = vmatpush2.msra.mxu0 0.0
  %955 = vmatprep.subr.mxu0 0.0
  %956 = vmatpush2.msra.mxu0 0.0
  %957 = vmatprep.subr.mxu0 0.0
  %958 = vmatpush2.msra.mxu0 0.0
  %959 = vmatprep.mubr.f32.mxu0 0.0
  %960 = vmatmul.mubr.f32.gmra.mxu0 %v893
  %v961 = vpop.f32.mrf.mxu0
  %v962 = vadd.f32 0.0, %v961
  %v963 = vpop.f32.mrf.mxu0
  %964 = vdwg.mxu0
  %v965 = vmul.f32 %v891, %v891
  %v967 = vsel %vm57, %v965, 0
  %969 = vmatprep.subr.mxu0 0.0
  %970 = vmatpush1.msra.mxu0 0.0
  %971 = vmatprep.subr.mxu0 0.0
  %972 = vmatpush1.msra.mxu0 0.0
  %973 = vmatprep.subr.mxu0 0.0
  %974 = vmatpush1.msra.mxu0 0.0
  %975 = vmatprep.subr.mxu0 0.0
  %976 = vmatpush1.msra.mxu0 0.0
  %977 = vmatprep.subr.mxu0 0.0
  %978 = vmatpush1.msra.mxu0 0.0
  %979 = vmatprep.subr.mxu0 0.0
  %980 = vmatpush1.msra.mxu0 0.0
  %981 = vmatprep.subr.mxu0 0.0
  %982 = vmatpush1.msra.mxu0 0.0
  %983 = vmatprep.subr.mxu0 0.0
  %984 = vmatpush1.msra.mxu0 0.0
  %985 = vmatprep.subr.mxu0 0.0
  %986 = vmatpush1.msra.mxu0 %v47
  %987 = vmatprep.subr.mxu0 0.0
  %988 = vmatpush1.msra.mxu0 %v46
  %989 = vmatprep.subr.mxu0 0.0
  %990 = vmatpush1.msra.mxu0 %v45
  %991 = vmatprep.subr.mxu0 0.0
  %992 = vmatpush1.msra.mxu0 %v44
  %993 = vmatprep.subr.mxu0 0.0
  %994 = vmatpush1.msra.mxu0 %v43
  %995 = vmatprep.subr.mxu0 0.0
  %996 = vmatpush1.msra.mxu0 %v42
  %997 = vmatprep.subr.mxu0 0.0
  %998 = vmatpush1.msra.mxu0 %v41
  %999 = vmatprep.subr.mxu0 0.0
  %1000 = vmatpush1.msra.mxu0 %v40
  %1001 = vmatprep.subr.mxu0 0.0
  %1002 = vmatpush2.msra.mxu0 0.0
  %1003 = vmatprep.subr.mxu0 0.0
  %1004 = vmatpush2.msra.mxu0 0.0
  %1005 = vmatprep.subr.mxu0 0.0
  %1006 = vmatpush2.msra.mxu0 0.0
  %1007 = vmatprep.subr.mxu0 0.0
  %1008 = vmatpush2.msra.mxu0 0.0
  %1009 = vmatprep.subr.mxu0 0.0
  %1010 = vmatpush2.msra.mxu0 0.0
  %1011 = vmatprep.subr.mxu0 0.0
  %1012 = vmatpush2.msra.mxu0 0.0
  %1013 = vmatprep.subr.mxu0 0.0
  %1014 = vmatpush2.msra.mxu0 0.0
  %1015 = vmatprep.subr.mxu0 0.0
  %1016 = vmatpush2.msra.mxu0 0.0
  %1017 = vmatprep.subr.mxu0 0.0
  %1018 = vmatpush2.msra.mxu0 0.0
  %1019 = vmatprep.subr.mxu0 0.0
  %1020 = vmatpush2.msra.mxu0 0.0
  %1021 = vmatprep.subr.mxu0 0.0
  %1022 = vmatpush2.msra.mxu0 0.0
  %1023 = vmatprep.subr.mxu0 0.0
  %1024 = vmatpush2.msra.mxu0 0.0
  %1025 = vmatprep.subr.mxu0 0.0
  %1026 = vmatpush2.msra.mxu0 0.0
  %1027 = vmatprep.subr.mxu0 0.0
  %1028 = vmatpush2.msra.mxu0 0.0
  %1029 = vmatprep.subr.mxu0 0.0
  %1030 = vmatpush2.msra.mxu0 0.0
  %1031 = vmatprep.subr.mxu0 0.0
  %1032 = vmatpush2.msra.mxu0 0.0
  %1033 = vmatprep.mubr.f32.mxu0 0.0
  %1034 = vmatmul.mubr.f32.gmra.mxu0 %v967
  %v1035 = vpop.f32.mrf.mxu0
  %v1036 = vadd.f32 0.0, %v1035
  %v1037 = vpop.f32.mrf.mxu0
  %1038 = vdwg.mxu0
  %v1039 = vsub.f32 %v891, %v962
  %v1040 = vmul.f32 %v962, %v962
  %v1041 = vsub.f32 %v1036, %v1040
  %v1042 = vadd.f32 %v1041, 1e-05
  %v1043 = vrsqrt.pop %v1042
  %v1044 = vmul.f32 %v1039, %v1043
  %v1045 = vld [vmem:[%s7 + $0x38] sm:$0xff]
  %v1046 = vmul.f32 %v1044, %v1045
  %v1047 = vld [vmem:[%s7 + $0x40] sm:$0xff]
  %v1048 = vadd.f32 %v1046, %v1047
  %1049 = vst.msk [vmem:[%s8] sm:$0xff] %vm57, %v1048
  // Predicated region
  $region34: #{transformer_encoder_layer.1} parent=0 // pred_check
    _
  $region35: #{transformer_encoder_layer.1} parent=0 // pred_check_branch
    %1051 = sbr.rel (0) target = $region37
  $region36: #{transformer_encoder_layer.1} parent=0 // pred_region
    _
  $region37: #{transformer_encoder_layer.1} parent=0 // pred_fallthru
    _
  // Predicated region
  $region38: #{transformer_encoder_layer.1} parent=0 // pred_check
    _
  $region39: #{transformer_encoder_layer.1} parent=0 // pred_check_branch
    %1053 = sbr.rel (0) target = $region41
  $region40: #{transformer_encoder_layer.1} parent=0 // pred_region
    _
  $region41: #{transformer_encoder_layer.1} parent=0 // pred_fallthru
    _

</llo_original>
